<compile_context>
chip_gen: v7x
topology: tpu7x:2x2x1
jax: 0.10.0
libtpu: 0.0.40
codegen_flags: <defaults>
</compile_context>

<pallas_src>
import functools

import jax
import jax.numpy as jnp
from jax.experimental import pallas as pl
from jax.experimental.pallas import tpu as pltpu

NUM_EMOTIONS = 7


def _total_ccc_kernel(yp_ref, yt_ref, out_ref,
                      sp_ref, st_ref, spp_ref, stt_ref, spt_ref,
                      *, total_rows, tile_rows):
    i = pl.program_id(0)
    nb = pl.num_programs(0)

    @pl.when(i == 0)
    def _init():
        sp_ref[...] = jnp.zeros_like(sp_ref)
        st_ref[...] = jnp.zeros_like(st_ref)
        spp_ref[...] = jnp.zeros_like(spp_ref)
        stt_ref[...] = jnp.zeros_like(stt_ref)
        spt_ref[...] = jnp.zeros_like(spt_ref)

    yp = yp_ref[...].astype(jnp.float32)   # (TB, C)  f32 accumulation always
    yt = yt_ref[...].astype(jnp.float32)
    TB, C = yp.shape

    if total_rows % tile_rows != 0:
        # Last tile is partial: zero the padded rows so they never contribute.
        row = jax.lax.broadcasted_iota(jnp.int32, (TB, C), 0) + i * tile_rows
        valid = row < total_rows
        yp = jnp.where(valid, yp, 0.0)
        yt = jnp.where(valid, yt, 0.0)

    # One-pass per-column sufficient statistics for this tile.
    sp_ref[...] += jnp.sum(yp, axis=0, keepdims=True)
    st_ref[...] += jnp.sum(yt, axis=0, keepdims=True)
    spp_ref[...] += jnp.sum(yp * yp, axis=0, keepdims=True)
    stt_ref[...] += jnp.sum(yt * yt, axis=0, keepdims=True)
    spt_ref[...] += jnp.sum(yp * yt, axis=0, keepdims=True)

    @pl.when(i == nb - 1)
    def _finalize():
        Bf = jnp.float32(total_rows)
        Ef = jnp.float32(NUM_EMOTIONS)

        sp = sp_ref[...]    # (1, C)
        st = st_ref[...]
        spp = spp_ref[...]
        stt = stt_ref[...]
        spt = spt_ref[...]

        col = jax.lax.broadcasted_iota(jnp.int32, (1, C), 1)
        cmask = col < NUM_EMOTIONS   # only the first 7 emotion columns count

        # ---- per-emotion (column-wise) CCC, N = B per column ----
        mp_c = sp / Bf
        mt_c = st / Bf
        ss_p_c = spp - sp * mp_c            # Σ(xp-μp)²
        ss_t_c = stt - st * mt_c            # Σ(xt-μt)²
        ss_pt_c = spt - sp * mt_c           # Σ(xp-μp)(xt-μt)
        var_p_c = ss_p_c / (Bf - 1.0)       # torch.var (unbiased)
        var_t_c = ss_t_c / (Bf - 1.0)
        cov_c = ss_pt_c / Bf                # torch.mean (biased)
        ccc_c = 2.0 * cov_c / (var_p_c + var_t_c + (mp_c - mt_c) ** 2)
        single_loss = jnp.sum(jnp.where(cmask, 1.0 - ccc_c, 0.0)) / Ef

        # ---- total CCC over the whole (B, 7) slab, N = B*7 ----
        zero = jnp.zeros_like(sp)
        Sp = jnp.sum(jnp.where(cmask, sp, zero))
        St = jnp.sum(jnp.where(cmask, st, zero))
        Spp = jnp.sum(jnp.where(cmask, spp, zero))
        Stt = jnp.sum(jnp.where(cmask, stt, zero))
        Spt = jnp.sum(jnp.where(cmask, spt, zero))
        Nf = Bf * Ef
        mp = Sp / Nf
        mt = St / Nf
        var_p = (Spp - Sp * mp) / (Nf - 1.0)
        var_t = (Stt - St * mt) / (Nf - 1.0)
        cov = (Spt - Sp * mt) / Nf
        ccc = 2.0 * cov / (var_p + var_t + (mp - mt) ** 2)
        total_loss = 1.0 - ccc

        out_ref[...] = jnp.full((1, 1), (total_loss + single_loss) * 0.5,
                                dtype=jnp.float32)


def total_ccc_loss(y_pred, y_true, *, tile_rows=512):
    """(CCCLoss + Single_CCCLoss)/2 over the first 7 columns of (B, C) inputs."""
    assert y_pred.shape == y_true.shape and y_pred.ndim == 2
    B, C = y_pred.shape
    assert C >= NUM_EMOTIONS, "need at least 7 emotion columns"

    # Batch tile: either the full batch (always a legal block) or a multiple
    # of 8 rows for the streamed multi-tile path.  Tiles are tiny in VMEM
    # (TB x C), so this fits comfortably on v5e/v6e/v7x with double-buffering.
    TB = min(tile_rows, B)
    if TB < B and TB % 8 != 0:
        TB = max(8, (TB // 8) * 8)
    nb = pl.cdiv(B, TB)

    kernel = functools.partial(_total_ccc_kernel, total_rows=B, tile_rows=TB)

    elt = jnp.dtype(y_pred.dtype).itemsize
    cost = pl.CostEstimate(
        flops=10 * B * C,
        transcendentals=0,
        bytes_accessed=2 * B * C * elt + 4,
    )

    out = pl.pallas_call(
        kernel,
        out_shape=jax.ShapeDtypeStruct((1, 1), jnp.float32),
        grid_spec=pltpu.PrefetchScalarGridSpec(
            num_scalar_prefetch=0,
            grid=(nb,),
            in_specs=[
                pl.BlockSpec((TB, C), lambda i: (i, 0)),
                pl.BlockSpec((TB, C), lambda i: (i, 0)),
            ],
            out_specs=pl.BlockSpec((1, 1), lambda i: (0, 0)),
            scratch_shapes=[pltpu.VMEM((1, C), jnp.float32)] * 5,
        ),
        compiler_params=pltpu.CompilerParams(
            dimension_semantics=("arbitrary",),
            vmem_limit_bytes=32 * 1024 * 1024,
        ),
        cost_estimate=cost,
    )(y_pred, y_true)
    return out[0, 0]


def _reference(y_pred, y_true):
    """Pure-JAX reference mirroring the PyTorch module (for sanity check)."""
    yp = y_pred[:, :NUM_EMOTIONS].astype(jnp.float32)
    yt = y_true[:, :NUM_EMOTIONS].astype(jnp.float32)

    def ccc_loss(a, b):
        ma, mb = jnp.mean(a), jnp.mean(b)
        va = jnp.sum((a - ma) ** 2) / (a.size - 1)
        vb = jnp.sum((b - mb) ** 2) / (b.size - 1)
        cov = jnp.mean((a - ma) * (b - mb))
        return 1.0 - 2.0 * cov / (va + vb + (ma - mb) ** 2)

    total = ccc_loss(yp.ravel(), yt.ravel())
    singles = [ccc_loss(yp[:, i], yt[:, i]) for i in range(NUM_EMOTIONS)]
    single = sum(singles) / NUM_EMOTIONS
    return (total + single) / 2.0


if __name__ == "__main__":
    key = jax.random.PRNGKey(0)
    k1, k2 = jax.random.split(key)

    # Case 1: single-tile path (B=16, C=8 — extra column beyond the 7 emotions).
    B, C = 16, 8
    y_pred = jax.random.normal(k1, (B, C), dtype=jnp.float32)
    y_true = jax.random.normal(k2, (B, C), dtype=jnp.float32)
    loss = total_ccc_loss(y_pred, y_true)
    jax.block_until_ready(loss)
    ref = _reference(y_pred, y_true)
    assert jnp.allclose(loss, ref, rtol=1e-4, atol=1e-5), (loss, ref)

    # Case 2: streamed multi-tile path with a partial last tile (B=20, TB=8).
    k3, k4 = jax.random.split(k1)
    B2, C2 = 20, 7
    yp2 = jax.random.normal(k3, (B2, C2), dtype=jnp.float32)
    yt2 = jax.random.normal(k4, (B2, C2), dtype=jnp.float32)
    loss2 = total_ccc_loss(yp2, yt2, tile_rows=8)
    jax.block_until_ready(loss2)
    ref2 = _reference(yp2, yt2)
    assert jnp.allclose(loss2, ref2, rtol=1e-4, atol=1e-5), (loss2, ref2)

    # TODO(synk): v7x could additionally split the batch stream across its 2
    # TensorCores (parallel partial-stat outputs combined in the wrapper).
    print("KERNEL_OK")
</pallas_src>

<mosaic_0001>
module attributes {stable_mosaic.version = 11 : i64} {
  func.func @_total_ccc_kernel(%arg0: i32, %arg1: memref<16x8xf32, #tpu.memory_space<vmem>>, %arg2: memref<16x8xf32, #tpu.memory_space<vmem>>, %arg3: memref<1x1xf32, #tpu.memory_space<vmem>>, %arg4: memref<1x8xf32, #tpu.memory_space<vmem>>, %arg5: memref<1x8xf32, #tpu.memory_space<vmem>>, %arg6: memref<1x8xf32, #tpu.memory_space<vmem>>, %arg7: memref<1x8xf32, #tpu.memory_space<vmem>>, %arg8: memref<1x8xf32, #tpu.memory_space<vmem>>) attributes {dimension_semantics = [#tpu.dimension_semantics<arbitrary>], iteration_bounds = array<i64: 1>, scalar_prefetch = 0 : i64, scratch_operands = 5 : i64, tpu.core_type = #tpu.core_type<tc>, window_params = [{transform_indices = @transform_0, window_bounds = array<i64: 16, 8>}, {transform_indices = @transform_1, window_bounds = array<i64: 16, 8>}, {pipeline_mode = #tpu.pipeline_mode<synchronous>, transform_indices = @transform_2, window_bounds = array<i64: 1, 1>}]} {
    %c0_i32 = arith.constant 0 : i32
    %0 = arith.cmpi eq, %arg0, %c0_i32 : i32
    %1 = arith.extui %0 : i1 to i32
    %c0_i32_0 = arith.constant 0 : i32
    %2 = arith.cmpi ne, %1, %c0_i32_0 : i32
    scf.if %2 {
      %cst_30 = arith.constant 0.000000e+00 : f32
      %36 = vector.broadcast %cst_30 : f32 to vector<1x8xf32>
      %c0_31 = arith.constant 0 : index
      %c0_32 = arith.constant 0 : index
      %37 = vector.load %arg4[%c0_31, %c0_32] : memref<1x8xf32, #tpu.memory_space<vmem>>, vector<1x8xf32>
      tpu.vector_store %arg4[%c0_31, %c0_32], %36 {strides = array<i32>} : memref<1x8xf32, #tpu.memory_space<vmem>>, vector<1x8xf32>,
      %cst_33 = arith.constant 0.000000e+00 : f32
      %38 = vector.broadcast %cst_33 : f32 to vector<1x8xf32>
      %c0_34 = arith.constant 0 : index
      %c0_35 = arith.constant 0 : index
      %39 = vector.load %arg5[%c0_34, %c0_35] : memref<1x8xf32, #tpu.memory_space<vmem>>, vector<1x8xf32>
      tpu.vector_store %arg5[%c0_34, %c0_35], %38 {strides = array<i32>} : memref<1x8xf32, #tpu.memory_space<vmem>>, vector<1x8xf32>,
      %cst_36 = arith.constant 0.000000e+00 : f32
      %40 = vector.broadcast %cst_36 : f32 to vector<1x8xf32>
      %c0_37 = arith.constant 0 : index
      %c0_38 = arith.constant 0 : index
      %41 = vector.load %arg6[%c0_37, %c0_38] : memref<1x8xf32, #tpu.memory_space<vmem>>, vector<1x8xf32>
      tpu.vector_store %arg6[%c0_37, %c0_38], %40 {strides = array<i32>} : memref<1x8xf32, #tpu.memory_space<vmem>>, vector<1x8xf32>,
      %cst_39 = arith.constant 0.000000e+00 : f32
      %42 = vector.broadcast %cst_39 : f32 to vector<1x8xf32>
      %c0_40 = arith.constant 0 : index
      %c0_41 = arith.constant 0 : index
      %43 = vector.load %arg7[%c0_40, %c0_41] : memref<1x8xf32, #tpu.memory_space<vmem>>, vector<1x8xf32>
      tpu.vector_store %arg7[%c0_40, %c0_41], %42 {strides = array<i32>} : memref<1x8xf32, #tpu.memory_space<vmem>>, vector<1x8xf32>,
      %cst_42 = arith.constant 0.000000e+00 : f32
      %44 = vector.broadcast %cst_42 : f32 to vector<1x8xf32>
      %c0_43 = arith.constant 0 : index
      %c0_44 = arith.constant 0 : index
      %45 = vector.load %arg8[%c0_43, %c0_44] : memref<1x8xf32, #tpu.memory_space<vmem>>, vector<1x8xf32>
      tpu.vector_store %arg8[%c0_43, %c0_44], %44 {strides = array<i32>} : memref<1x8xf32, #tpu.memory_space<vmem>>, vector<1x8xf32>,
    } else {
    }
    %c0 = arith.constant 0 : index
    %c0_1 = arith.constant 0 : index
    %3 = vector.load %arg1[%c0, %c0_1] : memref<16x8xf32, #tpu.memory_space<vmem>>, vector<16x8xf32>
    %c0_2 = arith.constant 0 : index
    %c0_3 = arith.constant 0 : index
    %4 = vector.load %arg2[%c0_2, %c0_3] : memref<16x8xf32, #tpu.memory_space<vmem>>, vector<16x8xf32>
    %c0_4 = arith.constant 0 : index
    %c0_5 = arith.constant 0 : index
    %5 = vector.load %arg4[%c0_4, %c0_5] : memref<1x8xf32, #tpu.memory_space<vmem>>, vector<1x8xf32>
    %cst = arith.constant dense<0.000000e+00> : vector<8xf32>
    %6 = vector.multi_reduction <add>, %3, %cst [0] : vector<16x8xf32> to vector<8xf32>
    %7 = vector.shape_cast %6 : vector<8xf32> to vector<1x8xf32>
    %8 = arith.addf %5, %7 : vector<1x8xf32>
    %c0_6 = arith.constant 0 : index
    %c0_7 = arith.constant 0 : index
    %9 = vector.load %arg4[%c0_6, %c0_7] : memref<1x8xf32, #tpu.memory_space<vmem>>, vector<1x8xf32>
    tpu.vector_store %arg4[%c0_6, %c0_7], %8 {strides = array<i32>} : memref<1x8xf32, #tpu.memory_space<vmem>>, vector<1x8xf32>,
    %c0_8 = arith.constant 0 : index
    %c0_9 = arith.constant 0 : index
    %10 = vector.load %arg5[%c0_8, %c0_9] : memref<1x8xf32, #tpu.memory_space<vmem>>, vector<1x8xf32>
    %cst_10 = arith.constant dense<0.000000e+00> : vector<8xf32>
    %11 = vector.multi_reduction <add>, %4, %cst_10 [0] : vector<16x8xf32> to vector<8xf32>
    %12 = vector.shape_cast %11 : vector<8xf32> to vector<1x8xf32>
    %13 = arith.addf %10, %12 : vector<1x8xf32>
    %c0_11 = arith.constant 0 : index
    %c0_12 = arith.constant 0 : index
    %14 = vector.load %arg5[%c0_11, %c0_12] : memref<1x8xf32, #tpu.memory_space<vmem>>, vector<1x8xf32>
    tpu.vector_store %arg5[%c0_11, %c0_12], %13 {strides = array<i32>} : memref<1x8xf32, #tpu.memory_space<vmem>>, vector<1x8xf32>,
    %c0_13 = arith.constant 0 : index
    %c0_14 = arith.constant 0 : index
    %15 = vector.load %arg6[%c0_13, %c0_14] : memref<1x8xf32, #tpu.memory_space<vmem>>, vector<1x8xf32>
    %16 = arith.mulf %3, %3 : vector<16x8xf32>
    %cst_15 = arith.constant dense<0.000000e+00> : vector<8xf32>
    %17 = vector.multi_reduction <add>, %16, %cst_15 [0] : vector<16x8xf32> to vector<8xf32>
    %18 = vector.shape_cast %17 : vector<8xf32> to vector<1x8xf32>
    %19 = arith.addf %15, %18 : vector<1x8xf32>
    %c0_16 = arith.constant 0 : index
    %c0_17 = arith.constant 0 : index
    %20 = vector.load %arg6[%c0_16, %c0_17] : memref<1x8xf32, #tpu.memory_space<vmem>>, vector<1x8xf32>
    tpu.vector_store %arg6[%c0_16, %c0_17], %19 {strides = array<i32>} : memref<1x8xf32, #tpu.memory_space<vmem>>, vector<1x8xf32>,
    %c0_18 = arith.constant 0 : index
    %c0_19 = arith.constant 0 : index
    %21 = vector.load %arg7[%c0_18, %c0_19] : memref<1x8xf32, #tpu.memory_space<vmem>>, vector<1x8xf32>
    %22 = arith.mulf %4, %4 : vector<16x8xf32>
    %cst_20 = arith.constant dense<0.000000e+00> : vector<8xf32>
    %23 = vector.multi_reduction <add>, %22, %cst_20 [0] : vector<16x8xf32> to vector<8xf32>
    %24 = vector.shape_cast %23 : vector<8xf32> to vector<1x8xf32>
    %25 = arith.addf %21, %24 : vector<1x8xf32>
    %c0_21 = arith.constant 0 : index
    %c0_22 = arith.constant 0 : index
    %26 = vector.load %arg7[%c0_21, %c0_22] : memref<1x8xf32, #tpu.memory_space<vmem>>, vector<1x8xf32>
    tpu.vector_store %arg7[%c0_21, %c0_22], %25 {strides = array<i32>} : memref<1x8xf32, #tpu.memory_space<vmem>>, vector<1x8xf32>,
    %c0_23 = arith.constant 0 : index
    %c0_24 = arith.constant 0 : index
    %27 = vector.load %arg8[%c0_23, %c0_24] : memref<1x8xf32, #tpu.memory_space<vmem>>, vector<1x8xf32>
    %28 = arith.mulf %3, %4 : vector<16x8xf32>
    %cst_25 = arith.constant dense<0.000000e+00> : vector<8xf32>
    %29 = vector.multi_reduction <add>, %28, %cst_25 [0] : vector<16x8xf32> to vector<8xf32>
    %30 = vector.shape_cast %29 : vector<8xf32> to vector<1x8xf32>
    %31 = arith.addf %27, %30 : vector<1x8xf32>
    %c0_26 = arith.constant 0 : index
    %c0_27 = arith.constant 0 : index
    %32 = vector.load %arg8[%c0_26, %c0_27] : memref<1x8xf32, #tpu.memory_space<vmem>>, vector<1x8xf32>
    tpu.vector_store %arg8[%c0_26, %c0_27], %31 {strides = array<i32>} : memref<1x8xf32, #tpu.memory_space<vmem>>, vector<1x8xf32>,
    %c0_i32_28 = arith.constant 0 : i32
    %33 = arith.cmpi eq, %arg0, %c0_i32_28 : i32
    %34 = arith.extui %33 : i1 to i32
    %c0_i32_29 = arith.constant 0 : i32
    %35 = arith.cmpi ne, %34, %c0_i32_29 : i32
    scf.if %35 {
      %c0_30 = arith.constant 0 : index
      %c0_31 = arith.constant 0 : index
      %36 = vector.load %arg4[%c0_30, %c0_31] : memref<1x8xf32, #tpu.memory_space<vmem>>, vector<1x8xf32>
      %c0_32 = arith.constant 0 : index
      %c0_33 = arith.constant 0 : index
      %37 = vector.load %arg5[%c0_32, %c0_33] : memref<1x8xf32, #tpu.memory_space<vmem>>, vector<1x8xf32>
      %c0_34 = arith.constant 0 : index
      %c0_35 = arith.constant 0 : index
      %38 = vector.load %arg6[%c0_34, %c0_35] : memref<1x8xf32, #tpu.memory_space<vmem>>, vector<1x8xf32>
      %c0_36 = arith.constant 0 : index
      %c0_37 = arith.constant 0 : index
      %39 = vector.load %arg7[%c0_36, %c0_37] : memref<1x8xf32, #tpu.memory_space<vmem>>, vector<1x8xf32>
      %c0_38 = arith.constant 0 : index
      %c0_39 = arith.constant 0 : index
      %40 = vector.load %arg8[%c0_38, %c0_39] : memref<1x8xf32, #tpu.memory_space<vmem>>, vector<1x8xf32>
      %41 = tpu.iota {dimensions = array<i32: 1>} : vector<1x8xi32>
      %c7_i32 = arith.constant 7 : i32
      %42 = vector.broadcast %c7_i32 : i32 to vector<1x8xi32>
      %43 = arith.cmpi slt, %41, %42 : vector<1x8xi32>
      %cst_40 = arith.constant 1.600000e+01 : f32
      %44 = vector.broadcast %cst_40 : f32 to vector<1x8xf32>
      %45 = arith.divf %36, %44 : vector<1x8xf32>
      %cst_41 = arith.constant 1.600000e+01 : f32
      %46 = vector.broadcast %cst_41 : f32 to vector<1x8xf32>
      %47 = arith.divf %37, %46 : vector<1x8xf32>
      %48 = arith.mulf %36, %45 : vector<1x8xf32>
      %49 = arith.subf %38, %48 : vector<1x8xf32>
      %50 = arith.mulf %37, %47 : vector<1x8xf32>
      %51 = arith.subf %39, %50 : vector<1x8xf32>
      %52 = arith.mulf %36, %47 : vector<1x8xf32>
      %53 = arith.subf %40, %52 : vector<1x8xf32>
      %cst_42 = arith.constant 1.600000e+01 : f32
      %cst_43 = arith.constant 1.000000e+00 : f32
      %54 = arith.subf %cst_42, %cst_43 : f32
      %55 = vector.broadcast %54 : f32 to vector<1x8xf32>
      %56 = arith.divf %49, %55 : vector<1x8xf32>
      %cst_44 = arith.constant 1.600000e+01 : f32
      %cst_45 = arith.constant 1.000000e+00 : f32
      %57 = arith.subf %cst_44, %cst_45 : f32
      %58 = vector.broadcast %57 : f32 to vector<1x8xf32>
      %59 = arith.divf %51, %58 : vector<1x8xf32>
      %cst_46 = arith.constant 1.600000e+01 : f32
      %60 = vector.broadcast %cst_46 : f32 to vector<1x8xf32>
      %61 = arith.divf %53, %60 : vector<1x8xf32>
      %cst_47 = arith.constant 2.000000e+00 : f32
      %62 = vector.broadcast %cst_47 : f32 to vector<1x8xf32>
      %63 = arith.mulf %62, %61 : vector<1x8xf32>
      %64 = arith.addf %56, %59 : vector<1x8xf32>
      %65 = arith.subf %45, %47 : vector<1x8xf32>
      %66 = arith.mulf %65, %65 : vector<1x8xf32>
      %67 = arith.addf %64, %66 : vector<1x8xf32>
      %68 = arith.divf %63, %67 : vector<1x8xf32>
      %cst_48 = arith.constant 1.000000e+00 : f32
      %69 = vector.broadcast %cst_48 : f32 to vector<1x8xf32>
      %70 = arith.subf %69, %68 : vector<1x8xf32>
      %cst_49 = arith.constant 0.000000e+00 : f32
      %71 = vector.broadcast %cst_49 : f32 to vector<1x8xf32>
      %72 = arith.select %43, %70, %71 : vector<1x8xi1>, vector<1x8xf32>
      %73 = vector.shape_cast %72 : vector<1x8xf32> to vector<1x1x8xf32>
      %cst_50 = arith.constant dense<0.000000e+00> : vector<1xf32>
      %74 = vector.multi_reduction <add>, %73, %cst_50 [1, 2] : vector<1x1x8xf32> to vector<1xf32>
      %75 = vector.shape_cast %74 : vector<1xf32> to vector<1x1x1xf32>
      %76 = vector.extract %75[0, 0, 0] : f32 from vector<1x1x1xf32>
      %cst_51 = arith.constant 7.000000e+00 : f32
      %77 = arith.divf %76, %cst_51 : f32
      %cst_52 = arith.constant 0.000000e+00 : f32
      %78 = vector.broadcast %cst_52 : f32 to vector<1x8xf32>
      %79 = arith.select %43, %36, %78 : vector<1x8xi1>, vector<1x8xf32>
      %80 = vector.shape_cast %79 : vector<1x8xf32> to vector<1x1x8xf32>
      %cst_53 = arith.constant dense<0.000000e+00> : vector<1xf32>
      %81 = vector.multi_reduction <add>, %80, %cst_53 [1, 2] : vector<1x1x8xf32> to vector<1xf32>
      %82 = vector.shape_cast %81 : vector<1xf32> to vector<1x1x1xf32>
      %83 = vector.extract %82[0, 0, 0] : f32 from vector<1x1x1xf32>
      %84 = arith.select %43, %37, %78 : vector<1x8xi1>, vector<1x8xf32>
      %85 = vector.shape_cast %84 : vector<1x8xf32> to vector<1x1x8xf32>
      %cst_54 = arith.constant dense<0.000000e+00> : vector<1xf32>
      %86 = vector.multi_reduction <add>, %85, %cst_54 [1, 2] : vector<1x1x8xf32> to vector<1xf32>
      %87 = vector.shape_cast %86 : vector<1xf32> to vector<1x1x1xf32>
      %88 = vector.extract %87[0, 0, 0] : f32 from vector<1x1x1xf32>
      %89 = arith.select %43, %38, %78 : vector<1x8xi1>, vector<1x8xf32>
      %90 = vector.shape_cast %89 : vector<1x8xf32> to vector<1x1x8xf32>
      %cst_55 = arith.constant dense<0.000000e+00> : vector<1xf32>
      %91 = vector.multi_reduction <add>, %90, %cst_55 [1, 2] : vector<1x1x8xf32> to vector<1xf32>
      %92 = vector.shape_cast %91 : vector<1xf32> to vector<1x1x1xf32>
      %93 = vector.extract %92[0, 0, 0] : f32 from vector<1x1x1xf32>
      %94 = arith.select %43, %39, %78 : vector<1x8xi1>, vector<1x8xf32>
      %95 = vector.shape_cast %94 : vector<1x8xf32> to vector<1x1x8xf32>
      %cst_56 = arith.constant dense<0.000000e+00> : vector<1xf32>
      %96 = vector.multi_reduction <add>, %95, %cst_56 [1, 2] : vector<1x1x8xf32> to vector<1xf32>
      %97 = vector.shape_cast %96 : vector<1xf32> to vector<1x1x1xf32>
      %98 = vector.extract %97[0, 0, 0] : f32 from vector<1x1x1xf32>
      %99 = arith.select %43, %40, %78 : vector<1x8xi1>, vector<1x8xf32>
      %100 = vector.shape_cast %99 : vector<1x8xf32> to vector<1x1x8xf32>
      %cst_57 = arith.constant dense<0.000000e+00> : vector<1xf32>
      %101 = vector.multi_reduction <add>, %100, %cst_57 [1, 2] : vector<1x1x8xf32> to vector<1xf32>
      %102 = vector.shape_cast %101 : vector<1xf32> to vector<1x1x1xf32>
      %103 = vector.extract %102[0, 0, 0] : f32 from vector<1x1x1xf32>
      %cst_58 = arith.constant 1.600000e+01 : f32
      %cst_59 = arith.constant 7.000000e+00 : f32
      %104 = arith.mulf %cst_58, %cst_59 : f32
      %105 = arith.divf %83, %104 : f32
      %106 = arith.divf %88, %104 : f32
      %107 = arith.mulf %83, %105 : f32
      %108 = arith.subf %93, %107 : f32
      %cst_60 = arith.constant 1.000000e+00 : f32
      %109 = arith.subf %104, %cst_60 : f32
      %110 = arith.divf %108, %109 : f32
      %111 = arith.mulf %88, %106 : f32
      %112 = arith.subf %98, %111 : f32
      %cst_61 = arith.constant 1.000000e+00 : f32
      %113 = arith.subf %104, %cst_61 : f32
      %114 = arith.divf %112, %113 : f32
      %115 = arith.mulf %83, %106 : f32
      %116 = arith.subf %103, %115 : f32
      %117 = arith.divf %116, %104 : f32
      %cst_62 = arith.constant 2.000000e+00 : f32
      %118 = arith.mulf %cst_62, %117 : f32
      %119 = arith.addf %110, %114 : f32
      %120 = arith.subf %105, %106 : f32
      %121 = arith.mulf %120, %120 : f32
      %122 = arith.addf %119, %121 : f32
      %123 = arith.divf %118, %122 : f32
      %cst_63 = arith.constant 1.000000e+00 : f32
      %124 = arith.subf %cst_63, %123 : f32
      %125 = arith.addf %124, %77 : f32
      %cst_64 = arith.constant 5.000000e-01 : f32
      %126 = arith.mulf %125, %cst_64 : f32
      %127 = vector.broadcast %126 : f32 to vector<1x1xf32>
      %c0_65 = arith.constant 0 : index
      %c0_66 = arith.constant 0 : index
      %128 = vector.load %arg3[%c0_65, %c0_66] : memref<1x1xf32, #tpu.memory_space<vmem>>, vector<1x1xf32>
      tpu.vector_store %arg3[%c0_65, %c0_66], %127 {strides = array<i32>} : memref<1x1xf32, #tpu.memory_space<vmem>>, vector<1x1xf32>,
    } else {
    }
    return
  }
  func.func @transform_0(%arg0: i32) -> (i32, i32) {
    %c0_i32 = arith.constant 0 : i32
    %c0_i32_0 = arith.constant 0 : i32
    return %arg0, %c0_i32 : i32, i32
  }
  func.func @transform_1(%arg0: i32) -> (i32, i32) {
    %c0_i32 = arith.constant 0 : i32
    %c0_i32_0 = arith.constant 0 : i32
    return %arg0, %c0_i32 : i32, i32
  }
  func.func @transform_2(%arg0: i32) -> (i32, i32) {
    %c0_i32 = arith.constant 0 : i32
    %c0_i32_0 = arith.constant 0 : i32
    %c0_i32_1 = arith.constant 0 : i32
    return %c0_i32, %c0_i32_0 : i32, i32
  }
}

</mosaic_0001>

<llo_original>
// kernel: tpu_custom_call.1
$region0: #{tpu_custom_call.1}
  #allocation0 [shape = 'u32[]', space=smem, size = 0x4, offset = 0x4, fixed_abs, tag = 'smem constant byte address 0x4 - core index']
  #allocation1 [shape = 'u32[144,128]{1,0:T(1,128)}', space=vmem, size = 0x12000, scoped, tag = 'internal scratch']
  #allocation2 [shape = 'f32[1,8]{1,0:T(1,128)}', space=vmem, size = 0x200, scoped, tag = 'scratch operand']
  #allocation3 [shape = 'f32[1,8]{1,0:T(1,128)}', space=vmem, size = 0x200, scoped, tag = 'scratch operand']
  #allocation4 [shape = 'f32[1,8]{1,0:T(1,128)}', space=vmem, size = 0x200, scoped, tag = 'scratch operand']
  #allocation5 [shape = 'f32[1,8]{1,0:T(1,128)}', space=vmem, size = 0x200, scoped, tag = 'scratch operand']
  #allocation6 [shape = 'f32[1,8]{1,0:T(1,128)}', space=vmem, size = 0x200, scoped, tag = 'scratch operand']
  %s0 = inlined_call_operand.vmem [shape: f32[16,8], index: 0, kind: input, shape index: {}]
  %s1 = inlined_call_operand.vmem [shape: f32[16,8], index: 1, kind: input, shape index: {}]
  %s2 = inlined_call_operand.hbm [shape: f32[1,1], index: 2, kind: output, shape index: {}]
  %s3 = sld [smem:[#allocation0]]
  $region26: #{tpu_custom_call.1} parent=0
    _
  %s5 = ssub.s32 1, %s3
  %s6 = scalar_select 0, %s5, %s3
  $region1: #{tpu_custom_call.1} parent=0
    #allocation7 [shape = 'u8[512]{0}', space=vmem, size = 0x400, scoped, tag = 'output window, operand 0, single buffered']
    #allocation8 [shape = 's32[1]{0}', space=sflag, size = 0x4, scoped, tag = 'scoped memory for tpu_custom_call.1']
    %7 = vsyncpa [#allocation8], 0
    // Predicated region
    $region2: #{tpu_custom_call.1} parent=1 // pred_check
      _
    $region3: #{tpu_custom_call.1} parent=1 // pred_check_branch
      %9 = sbr.rel (0) target = $region5
    $region4: #{tpu_custom_call.1} parent=1 // pred_region
      _
    $region5: #{tpu_custom_call.1} parent=1 // pred_fallthru
      _
    // Predicated region
    $region6: #{tpu_custom_call.1} parent=1 // pred_check
      _
    $region7: #{tpu_custom_call.1} parent=1 // pred_check_branch
      %11 = sbr.rel (0) target = $region9
    $region8: #{tpu_custom_call.1} parent=1 // pred_region
      _
    $region9: #{tpu_custom_call.1} parent=1 // pred_fallthru
      _
    %p12 = scmp.eq.s32.totalorder 0, 0
    // Predicated region
    $region10: #{tpu_custom_call.1} parent=1 // pred_check
      %p13 = pneg %p12
    $region11: #{tpu_custom_call.1} parent=1 // pred_check_branch
      %15 = sbr.rel (%p13) target = $region13
    $region12: #{tpu_custom_call.1} parent=1 // pred_region
      %vm16 = vcmask 57344
      %17 = vst.msk [vmem:[#allocation2] sm:$0x1] %vm16, 0.0
      %18 = vst.msk [vmem:[#allocation3] sm:$0x1] %vm16, 0.0
      %19 = vst.msk [vmem:[#allocation4] sm:$0x1] %vm16, 0.0
      %20 = vst.msk [vmem:[#allocation5] sm:$0x1] %vm16, 0.0
      %21 = vst.msk [vmem:[#allocation6] sm:$0x1] %vm16, 0.0
    $region13: #{tpu_custom_call.1} parent=1 // pred_fallthru
      _
    %v22 = vld [vmem:[%s0] sm:$0xff]
    %v23 = vld [vmem:[%s0 + $0x8] sm:$0xff]
    %v24 = vld [vmem:[%s1] sm:$0xff]
    %v25 = vld [vmem:[%s1 + $0x8] sm:$0xff]
    %v26 = vld [vmem:[#allocation2] sm:$0x1]
    %vm27 = vcmask 64512
    %v28 = vsel %vm27, %v22, 0.0
    %v29 = vsel %vm27, %v23, 0.0
    %v30 = vadd.f32 %v28, %v29
    %v31 = vrot.slane %v30, 4
    %v32 = vadd.f32 %v30, %v31
    %v33 = vrot.slane %v32, 2
    %v34 = vadd.f32 %v32, %v33
    %v35 = vrot.slane %v34, 1
    %v36 = vadd.f32 %v34, %v35
    %v37 = vadd.f32 %v26, %v36
    %vm38 = vcmask 57344
    %39 = vst.msk [vmem:[#allocation2] sm:$0x1] %vm38, %v37
    %v40 = vld [vmem:[#allocation3] sm:$0x1]
    %v41 = vsel %vm27, %v24, 0.0
    %v42 = vsel %vm27, %v25, 0.0
    %v43 = vadd.f32 %v41, %v42
    %v44 = vrot.slane %v43, 4
    %v45 = vadd.f32 %v43, %v44
    %v46 = vrot.slane %v45, 2
    %v47 = vadd.f32 %v45, %v46
    %v48 = vrot.slane %v47, 1
    %v49 = vadd.f32 %v47, %v48
    %v50 = vadd.f32 %v40, %v49
    %51 = vst.msk [vmem:[#allocation3] sm:$0x1] %vm38, %v50
    %v52 = vld [vmem:[#allocation4] sm:$0x1]
    %v53 = vmul.f32 %v22, %v22
    %v54 = vmul.f32 %v23, %v23
    %v55 = vsel %vm27, %v53, 0.0
    %v56 = vsel %vm27, %v54, 0.0
    %v57 = vadd.f32 %v55, %v56
    %v58 = vrot.slane %v57, 4
    %v59 = vadd.f32 %v57, %v58
    %v60 = vrot.slane %v59, 2
    %v61 = vadd.f32 %v59, %v60
    %v62 = vrot.slane %v61, 1
    %v63 = vadd.f32 %v61, %v62
    %v64 = vadd.f32 %v52, %v63
    %65 = vst.msk [vmem:[#allocation4] sm:$0x1] %vm38, %v64
    %v66 = vld [vmem:[#allocation5] sm:$0x1]
    %v67 = vmul.f32 %v24, %v24
    %v68 = vmul.f32 %v25, %v25
    %v69 = vsel %vm27, %v67, 0.0
    %v70 = vsel %vm27, %v68, 0.0
    %v71 = vadd.f32 %v69, %v70
    %v72 = vrot.slane %v71, 4
    %v73 = vadd.f32 %v71, %v72
    %v74 = vrot.slane %v73, 2
    %v75 = vadd.f32 %v73, %v74
    %v76 = vrot.slane %v75, 1
    %v77 = vadd.f32 %v75, %v76
    %v78 = vadd.f32 %v66, %v77
    %79 = vst.msk [vmem:[#allocation5] sm:$0x1] %vm38, %v78
    %v80 = vld [vmem:[#allocation6] sm:$0x1]
    %v81 = vmul.f32 %v22, %v24
    %v82 = vmul.f32 %v23, %v25
    %v83 = vsel %vm27, %v81, 0.0
    %v84 = vsel %vm27, %v82, 0.0
    %v85 = vadd.f32 %v83, %v84
    %v86 = vrot.slane %v85, 4
    %v87 = vadd.f32 %v85, %v86
    %v88 = vrot.slane %v87, 2
    %v89 = vadd.f32 %v87, %v88
    %v90 = vrot.slane %v89, 1
    %v91 = vadd.f32 %v89, %v90
    %v92 = vadd.f32 %v80, %v91
    %93 = vst.msk [vmem:[#allocation6] sm:$0x1] %vm38, %v92
    // Predicated region
    $region14: #{tpu_custom_call.1} parent=1 // pred_check
      %p94 = pneg %p12
    $region15: #{tpu_custom_call.1} parent=1 // pred_check_branch
      %96 = sbr.rel (%p94) target = $region17
    $region16: #{tpu_custom_call.1} parent=1 // pred_region
      %v97 = vld [vmem:[#allocation2] sm:$0x1]
      %v98 = vld [vmem:[#allocation3] sm:$0x1]
      %v99 = vld [vmem:[#allocation4] sm:$0x1]
      %v100 = vld [vmem:[#allocation5] sm:$0x1]
      %v101 = vld [vmem:[#allocation6] sm:$0x1]
      %v102 = vlaneseq
      %v103 = vand.u32 %v102, 127
      %vm104 = vcmp.lt.s32.totalorder %v103, 7
      %v105 = vrcp.pop 16.0
      %v106 = vmul.f32 %v97, %v105
      %v107 = vmul.f32 %v98, %v105
      %v108 = vmul.f32 %v97, %v106
      %v109 = vsub.f32 %v99, %v108
      %v110 = vmul.f32 %v98, %v107
      %v111 = vsub.f32 %v100, %v110
      %v112 = vmul.f32 %v97, %v107
      %v113 = vsub.f32 %v101, %v112
      %v114 = vrcp.pop 15.0
      %v115 = vmul.f32 %v109, %v114
      %v116 = vmul.f32 %v111, %v114
      %v117 = vmul.f32 %v113, %v105
      %v118 = vmul.f32 %v117, 2.0
      %v119 = vadd.f32 %v115, %v116
      %v120 = vsub.f32 %v106, %v107
      %v121 = vmul.f32 %v120, %v120
      %v122 = vadd.f32 %v119, %v121
      %v123 = vrcp.pop %v122
      %v124 = vmul.f32 %v118, %v123
      %v125 = vsub.f32 1.0, %v124
      %v126 = vsel %vm104, %v125, 0.0
      %v127 = vsel %vm38, %v126, 0.0
      %128 = vadd.xlane.f32.xlu0 %v127
      %v129 = vpop.xlane.xlu0 %128
      %v130 = vrot.slane %v129, 4
      %v131 = vadd.f32 %v129, %v130
      %v132 = vrot.slane %v131, 2
      %v133 = vadd.f32 %v131, %v132
      %v134 = vrot.slane %v133, 1
      %v135 = vadd.f32 %v133, %v134
      %s136 = vtos %v135
      %v137 = vrcp.pop 7.0
      %s138 = vtos %v137
      %s139 = smul.f32 %s136, %s138
      %v140 = vsel %vm104, %v97, 0.0
      %v141 = vsel %vm38, %v140, 0.0
      %142 = vadd.xlane.f32.xlu0 %v141
      %v143 = vpop.xlane.xlu0 %142
      %v144 = vrot.slane %v143, 4
      %v145 = vadd.f32 %v143, %v144
      %v146 = vrot.slane %v145, 2
      %v147 = vadd.f32 %v145, %v146
      %v148 = vrot.slane %v147, 1
      %v149 = vadd.f32 %v147, %v148
      %s150 = vtos %v149
      %v151 = vsel %vm104, %v98, 0.0
      %v152 = vsel %vm38, %v151, 0.0
      %153 = vadd.xlane.f32.xlu0 %v152
      %v154 = vpop.xlane.xlu0 %153
      %v155 = vrot.slane %v154, 4
      %v156 = vadd.f32 %v154, %v155
      %v157 = vrot.slane %v156, 2
      %v158 = vadd.f32 %v156, %v157
      %v159 = vrot.slane %v158, 1
      %v160 = vadd.f32 %v158, %v159
      %s161 = vtos %v160
      %v162 = vsel %vm104, %v99, 0.0
      %v163 = vsel %vm38, %v162, 0.0
      %164 = vadd.xlane.f32.xlu0 %v163
      %v165 = vpop.xlane.xlu0 %164
      %v166 = vrot.slane %v165, 4
      %v167 = vadd.f32 %v165, %v166
      %v168 = vrot.slane %v167, 2
      %v169 = vadd.f32 %v167, %v168
      %v170 = vrot.slane %v169, 1
      %v171 = vadd.f32 %v169, %v170
      %s172 = vtos %v171
      %v173 = vsel %vm104, %v100, 0.0
      %v174 = vsel %vm38, %v173, 0.0
      %175 = vadd.xlane.f32.xlu0 %v174
      %v176 = vpop.xlane.xlu0 %175
      %v177 = vrot.slane %v176, 4
      %v178 = vadd.f32 %v176, %v177
      %v179 = vrot.slane %v178, 2
      %v180 = vadd.f32 %v178, %v179
      %v181 = vrot.slane %v180, 1
      %v182 = vadd.f32 %v180, %v181
      %s183 = vtos %v182
      %v184 = vsel %vm104, %v101, 0.0
      %v185 = vsel %vm38, %v184, 0.0
      %186 = vadd.xlane.f32.xlu0 %v185
      %v187 = vpop.xlane.xlu0 %186
      %v188 = vrot.slane %v187, 4
      %v189 = vadd.f32 %v187, %v188
      %v190 = vrot.slane %v189, 2
      %v191 = vadd.f32 %v189, %v190
      %v192 = vrot.slane %v191, 1
      %v193 = vadd.f32 %v191, %v192
      %s194 = vtos %v193
      %v195 = vrcp.pop 112.0
      %s196 = vtos %v195
      %s197 = smul.f32 %s150, %s196
      %v198 = vrcp.pop 112.0
      %s199 = vtos %v198
      %s200 = smul.f32 %s161, %s199
      %s201 = smul.f32 %s150, %s197
      %s202 = ssub.f32 %s172, %s201
      %v203 = vrcp.pop 111.0
      %s204 = vtos %v203
      %s205 = smul.f32 %s202, %s204
      %s206 = smul.f32 %s161, %s200
      %s207 = ssub.f32 %s183, %s206
      %v208 = vrcp.pop 111.0
      %s209 = vtos %v208
      %s210 = smul.f32 %s207, %s209
      %s211 = smul.f32 %s150, %s200
      %s212 = ssub.f32 %s194, %s211
      %v213 = vrcp.pop 112.0
      %s214 = vtos %v213
      %s215 = smul.f32 %s212, %s214
      %s216 = smul.f32 %s215, 2.0
      %s217 = sadd.f32 %s205, %s210
      %s218 = ssub.f32 %s197, %s200
      %s219 = smul.f32 %s218, %s218
      %s220 = sadd.f32 %s217, %s219
      %v221 = vstv %s220
      %v222 = vrcp.pop %v221
      %s223 = vtos %v222
      %s224 = smul.f32 %s216, %s223
      %s225 = ssub.f32 1.0, %s224
      %s226 = sadd.f32 %s225, %s139
      %s227 = smul.f32 %s226, 0.5
      %v228 = vstv %s227
      %vm229 = vcmask 0
      %230 = vst.msk [vmem:[#allocation7] sm:$0x1] %vm229, %v228
    $region17: #{tpu_custom_call.1} parent=1 // pred_fallthru
      _
    // Predicated region
    $region18: #{tpu_custom_call.1} parent=1 // pred_check
      _
    $region19: #{tpu_custom_call.1} parent=1 // pred_check_branch
      %232 = sbr.rel (0) target = $region21
    $region20: #{tpu_custom_call.1} parent=1 // pred_region
      %s234 = ssub.s32 16, 16
      %235 = vsyncadd [#allocation8], %s234
      %s237 = sshll.u32 [#allocation7], 4
      %s238 = int_to_ptr.vmem [resolvable:$true] %s237
      %240 = dma.vmem_to_hbm [thread:$0]  %s238, 16, %s2, [#allocation8]
    $region21: #{tpu_custom_call.1} parent=1 // pred_fallthru
      _
    // Predicated region
    $region22: #{tpu_custom_call.1} parent=1 // pred_check
      _
    $region23: #{tpu_custom_call.1} parent=1 // pred_check_branch
      %242 = sbr.rel (0) target = $region25
    $region24: #{tpu_custom_call.1} parent=1 // pred_region
      %243 = dma.done [#allocation8], 16
    $region25: #{tpu_custom_call.1} parent=1 // pred_fallthru
      _
    %244 = vsyncpa [#allocation8], 1

</llo_original>
